<compile_context>
chip_gen: v5e
topology: v5e:2x2
jax: 0.10.0
libtpu: 0.0.40
codegen_flags: <defaults>
</compile_context>

<pallas_src>
from typing import NamedTuple

import jax
import jax.numpy as jnp
import numpy as np
from jax import lax
from jax.experimental import pallas as pl
from jax.experimental.pallas import tpu as pltpu

_LANES = 128
_SUB = 8          # f32 sublanes per vreg tile


def _cdiv(a, b):
    return (a + b - 1) // b


def _round_up(a, b):
    return _cdiv(a, b) * b


class _Seg(NamedTuple):
    rows: int        # lane-dense rows of this segment's (rows, 128) view
    weight: float    # fm_scale / true numel (compile-time constant)
    group: int       # dtype-group index -> which shared VMEM buffer pair
    core: int        # which grid index ("core") processes this segment


def _make_kernel(segments, n_groups, tm):
    """Builds the kernel body. All segment metadata is trace-time static."""
    n_in = 2 * len(segments)

    def kernel(*refs):
        in_refs = refs[:n_in]                                   # HBM (ANY) refs
        o_ref = refs[n_in]                                      # (1, 8, 128) f32
        bufs = refs[n_in + 1: n_in + 1 + 2 * n_groups]          # VMEM dbl-buffers
        sem = refs[n_in + 1 + 2 * n_groups]                     # DMA sems (2, 2)
        acc = refs[n_in + 2 + 2 * n_groups]                     # (8, 128) f32

        acc[...] = jnp.zeros_like(acc)
        core = pl.program_id(0)

        def dma(hbm, buf, sem_idx, slot, start, nrows):
            src = hbm.at[pl.ds(start, nrows)]
            dst = buf.at[slot] if nrows == tm else buf.at[slot, pl.ds(0, nrows)]
            return pltpu.make_async_copy(src, dst, sem.at[sem_idx, slot])

        def accumulate(gbuf, tbuf, slot, nrows, weight):
            # Read rows padded up to a sublane multiple; mask the (stale) tail
            # rows so the reshape-sum path is uniform and avoids sub-8 RMWs.
            rows_p = _round_up(nrows, _SUB)
            if rows_p == tm:
                g, t = gbuf[slot], tbuf[slot]
            else:
                g = gbuf[slot, pl.ds(0, rows_p)]
                t = tbuf[slot, pl.ds(0, rows_p)]
            d = jnp.abs(g.astype(jnp.float32) - t.astype(jnp.float32))
            if rows_p != nrows:
                row_ids = lax.broadcasted_iota(jnp.int32, (rows_p, _LANES), 0)
                d = jnp.where(row_ids < nrows, d, 0.0)
            # Layout-preserving (rows_p,128)->(rows_p//8,8,128); sum over the
            # leading (untiled) axis is pure VPU accumulation.
            acc[...] += jnp.float32(weight) * jnp.sum(
                d.reshape(rows_p // _SUB, _SUB, _LANES), axis=0)

        def process(g_hbm, t_hbm, gbuf, tbuf, rows, weight):
            full, rem = divmod(rows, tm)       # python ints (static shapes)

            if full > 0:
                # Prime chunk 0.
                dma(g_hbm, gbuf, 0, 0, 0, tm).start()
                dma(t_hbm, tbuf, 1, 0, 0, tm).start()

                @pl.loop(0, full)
                def _(c):
                    slot = c % 2
                    nxt = (c + 1) % 2
                    dma(g_hbm, gbuf, 0, slot, 0, tm).wait()
                    dma(t_hbm, tbuf, 1, slot, 0, tm).wait()

                    @pl.when(c + 1 < full)
                    def _():
                        start = pl.multiple_of((c + 1) * tm, tm)
                        dma(g_hbm, gbuf, 0, nxt, start, tm).start()
                        dma(t_hbm, tbuf, 1, nxt, start, tm).start()

                    if rem:
                        @pl.when(c + 1 == full)
                        def _():
                            dma(g_hbm, gbuf, 0, nxt, full * tm, rem).start()
                            dma(t_hbm, tbuf, 1, nxt, full * tm, rem).start()

                    accumulate(gbuf, tbuf, slot, tm, weight)

            if rem:
                slot_t = full % 2              # static
                if full == 0:                  # tiny segment: single chunk
                    dma(g_hbm, gbuf, 0, slot_t, 0, rem).start()
                    dma(t_hbm, tbuf, 1, slot_t, 0, rem).start()
                dma(g_hbm, gbuf, 0, slot_t, 0, rem).wait()
                dma(t_hbm, tbuf, 1, slot_t, 0, rem).wait()
                accumulate(gbuf, tbuf, slot_t, rem, weight)

        for j, seg in enumerate(segments):
            gbuf = bufs[2 * seg.group]
            tbuf = bufs[2 * seg.group + 1]

            @pl.when(core == seg.core)
            def _(j=j, seg=seg, gbuf=gbuf, tbuf=tbuf):
                process(in_refs[2 * j], in_refs[2 * j + 1], gbuf, tbuf,
                        seg.rows, seg.weight)

        o_ref[...] = acc[...][None, :, :]      # lane-dense per-core partial

    return kernel


def fm_loss(target_features, gen_features, fm_scale, *, chunk_rows=4096):
    """Pallas implementation of FMLoss.forward(target_features, gen_features)."""
    assert len(target_features) == len(gen_features) and len(gen_features) > 0

    flat_inputs = []    # interleaved [gen_0, tgt_0, gen_1, tgt_1, ...]
    metas = []          # (rows, weight, dtype)
    for g, t in zip(gen_features, target_features):
        assert g.shape == t.shape, (g.shape, t.shape)
        numel = int(np.prod(g.shape))
        assert numel > 0
        dt = np.dtype(jnp.promote_types(g.dtype, t.dtype))
        gf, tf = jnp.ravel(g), jnp.ravel(t)     # free reshape (metadata only under jit)
        if gf.dtype != dt:
            gf = gf.astype(dt)
        if tf.dtype != dt:
            tf = tf.astype(dt)
        pad = (-numel) % _LANES
        if pad:                                  # ragged only: tiny 128-pad copy
            gf = jnp.pad(gf, (0, pad))           # |0 - 0| contributes 0
            tf = jnp.pad(tf, (0, pad))
        rows = (numel + pad) // _LANES
        flat_inputs.append(gf.reshape(rows, _LANES))
        flat_inputs.append(tf.reshape(rows, _LANES))
        metas.append((rows, float(fm_scale) / float(numel), dt))

    # Chunk rows: multiple of 8, no bigger than the largest segment needs.
    max_rows = max(m[0] for m in metas)
    tm = max(_SUB, min(int(chunk_rows), _round_up(max_rows, _SUB)))
    tm = _round_up(tm, _SUB)

    # Group segments by dtype -> one shared (2, tm, 128) double buffer pair each.
    group_dtypes = []
    seg_groups = []
    for rows, w, dt in metas:
        if dt not in group_dtypes:
            group_dtypes.append(dt)
        seg_groups.append(group_dtypes.index(dt))

    # Greedy load-balance segments over the (parallel) grid points / TCs.
    n_cores = min(2, len(metas))
    loads = [0] * n_cores
    seg_cores = [0] * len(metas)
    for j in sorted(range(len(metas)), key=lambda j: -metas[j][0]):
        c = loads.index(min(loads))
        seg_cores[j] = c
        loads[c] += metas[j][0]

    segments = [_Seg(rows=m[0], weight=m[1], group=seg_groups[j], core=seg_cores[j])
                for j, m in enumerate(metas)]

    scratch = []
    for dt in group_dtypes:
        scratch.append(pltpu.VMEM((2, tm, _LANES), dt))   # gen double buffer
        scratch.append(pltpu.VMEM((2, tm, _LANES), dt))   # tgt double buffer
    scratch.append(pltpu.SemaphoreType.DMA((2, 2)))       # [gen/tgt][slot]
    scratch.append(pltpu.VMEM((_SUB, _LANES), jnp.float32))

    buf_bytes = sum(2 * 2 * tm * _LANES * dt.itemsize for dt in group_dtypes)
    vmem_limit = int(max(buf_bytes + (8 << 20), 16 << 20))

    total_bytes = sum(2 * s.rows * _LANES * group_dtypes[s.group].itemsize
                      for s in segments)
    total_elems = sum(s.rows * _LANES for s in segments)
    cost = pl.CostEstimate(flops=4 * total_elems, transcendentals=0,
                           bytes_accessed=total_bytes)

    out = pl.pallas_call(
        _make_kernel(segments, len(group_dtypes), tm),
        out_shape=jax.ShapeDtypeStruct((n_cores, _SUB, _LANES), jnp.float32),
        grid_spec=pltpu.PrefetchScalarGridSpec(
            num_scalar_prefetch=0,
            grid=(n_cores,),
            in_specs=[pl.BlockSpec(memory_space=pl.ANY)] * len(flat_inputs),
            out_specs=pl.BlockSpec((1, _SUB, _LANES), lambda c: (c, 0, 0)),
            scratch_shapes=scratch,
        ),
        compiler_params=pltpu.CompilerParams(
            dimension_semantics=("parallel",),
            vmem_limit_bytes=vmem_limit),
        cost_estimate=cost,
    )(*flat_inputs)

    return jnp.sum(out)    # tiny (n_cores, 8, 128) reduce in XLA


def _reference(target_features, gen_features, fm_scale):
    total = jnp.float32(0.0)
    for t, g in zip(target_features, gen_features):
        total = total + jnp.mean(jnp.abs(g.astype(jnp.float32) -
                                         t.astype(jnp.float32)))
    return jnp.float32(fm_scale) * total


if __name__ == "__main__":
    key = jax.random.PRNGKey(0)
    keys = jax.random.split(key, 8)

    # Multi-scale discriminator feature maps (target vs generated), matching
    # shapes pairwise; the last one's numel is not a multiple of 128 to
    # exercise the ragged-pad path.
    shapes = [(2, 4, 32, 16), (2, 8, 16, 8), (2, 16, 48), (2, 3, 20, 6)]
    target_features = [jax.random.normal(keys[j], s, dtype=jnp.float32)
                       for j, s in enumerate(shapes)]
    gen_features = [jax.random.normal(keys[4 + j], s, dtype=jnp.float32)
                    for j, s in enumerate(shapes)]
    fm_scale = 2.0

    loss = jax.block_until_ready(
        fm_loss(target_features, gen_features, fm_scale))
    ref = jax.block_until_ready(
        _reference(target_features, gen_features, fm_scale))
    np.testing.assert_allclose(np.asarray(loss), np.asarray(ref),
                               rtol=1e-5, atol=1e-6)

    # Small chunk size: exercises the multi-chunk double-buffered loop, the
    # prefetched tail chunks and the masked sub-8-row tails.
    loss_small = jax.block_until_ready(
        fm_loss(target_features, gen_features, fm_scale, chunk_rows=8))
    np.testing.assert_allclose(np.asarray(loss_small), np.asarray(ref),
                               rtol=1e-5, atol=1e-6)

    print("KERNEL_OK")
</pallas_src>

<mosaic_0001>
module attributes {stable_mosaic.version = 11 : i64} {
  func.func @kernel(%arg0: i32, %arg1: memref<32x128xf32, #tpu.memory_space<any>>, %arg2: memref<32x128xf32, #tpu.memory_space<any>>, %arg3: memref<16x128xf32, #tpu.memory_space<any>>, %arg4: memref<16x128xf32, #tpu.memory_space<any>>, %arg5: memref<12x128xf32, #tpu.memory_space<any>>, %arg6: memref<12x128xf32, #tpu.memory_space<any>>, %arg7: memref<6x128xf32, #tpu.memory_space<any>>, %arg8: memref<6x128xf32, #tpu.memory_space<any>>, %arg9: memref<1x8x128xf32, #tpu.memory_space<vmem>>, %arg10: memref<2x32x128xf32, #tpu.memory_space<vmem>>, %arg11: memref<2x32x128xf32, #tpu.memory_space<vmem>>, %arg12: memref<2x2x!tpu.dma_semaphore, #tpu.memory_space<semaphore_mem>>, %arg13: memref<8x128xf32, #tpu.memory_space<vmem>>) attributes {dimension_semantics = [#tpu.dimension_semantics<parallel>], iteration_bounds = array<i64: 2>, scalar_prefetch = 0 : i64, scratch_operands = 4 : i64, tpu.core_type = #tpu.core_type<tc>, window_params = [{}, {}, {}, {}, {}, {}, {}, {}, {transform_indices = @transform_8, window_bounds = array<i64: 1, 8, 128>}]} {
    %cst = arith.constant 0.000000e+00 : f32
    %0 = vector.broadcast %cst : f32 to vector<8x128xf32>
    %c0 = arith.constant 0 : index
    %c0_0 = arith.constant 0 : index
    %1 = vector.load %arg13[%c0, %c0_0] : memref<8x128xf32, #tpu.memory_space<vmem>>, vector<8x128xf32>
    tpu.vector_store %arg13[%c0, %c0_0], %0 {strides = array<i32>} : memref<8x128xf32, #tpu.memory_space<vmem>>, vector<8x128xf32>,
    %c0_i32 = arith.constant 0 : i32
    %2 = arith.cmpi eq, %arg0, %c0_i32 : i32
    %3 = arith.extui %2 : i1 to i32
    %c0_i32_1 = arith.constant 0 : i32
    %4 = arith.cmpi ne, %3, %c0_i32_1 : i32
    scf.if %4 {
      %c0_i32_12 = arith.constant 0 : i32
      %c0_i32_13 = arith.constant 0 : i32
      %c0_i32_14 = arith.constant 0 : i32
      %c0_i32_15 = arith.constant 0 : i32
      %c0_i32_16 = arith.constant 0 : i32
      %17 = tpu.memref_slice %arg1[%c0_i32_15, %c0_i32_16] : memref<32x128xf32, #tpu.memory_space<any>> -> memref<32x128xf32, #tpu.memory_space<any>>
      %c0_i32_17 = arith.constant 0 : i32
      %c0_i32_18 = arith.constant 0 : i32
      %18 = tpu.memref_slice %arg10[%c0_i32_12, %c0_i32_17, %c0_i32_18] : memref<2x32x128xf32, #tpu.memory_space<vmem>> -> memref<1x32x128xf32, #tpu.memory_space<vmem>>
      %19 = tpu.memref_squeeze %18 : memref<1x32x128xf32, #tpu.memory_space<vmem>> -> memref<32x128xf32, #tpu.memory_space<vmem>>
      %20 = tpu.memref_slice %arg12[%c0_i32_13, %c0_i32_14] : memref<2x2x!tpu.dma_semaphore, #tpu.memory_space<semaphore_mem>> -> memref<1x1x!tpu.dma_semaphore, #tpu.memory_space<semaphore_mem>>
      %21 = tpu.memref_squeeze %20 : memref<1x1x!tpu.dma_semaphore, #tpu.memory_space<semaphore_mem>> -> memref<!tpu.dma_semaphore, #tpu.memory_space<semaphore_mem>>
      tpu.enqueue_dma source(%17 : memref<32x128xf32, #tpu.memory_space<any>>) target(%19 : memref<32x128xf32, #tpu.memory_space<vmem>>) target_semaphore(%21 : memref<!tpu.dma_semaphore, #tpu.memory_space<semaphore_mem>>)
      %c0_i32_19 = arith.constant 0 : i32
      %c1_i32_20 = arith.constant 1 : i32
      %c0_i32_21 = arith.constant 0 : i32
      %c0_i32_22 = arith.constant 0 : i32
      %c0_i32_23 = arith.constant 0 : i32
      %22 = tpu.memref_slice %arg2[%c0_i32_22, %c0_i32_23] : memref<32x128xf32, #tpu.memory_space<any>> -> memref<32x128xf32, #tpu.memory_space<any>>
      %c0_i32_24 = arith.constant 0 : i32
      %c0_i32_25 = arith.constant 0 : i32
      %23 = tpu.memref_slice %arg11[%c0_i32_19, %c0_i32_24, %c0_i32_25] : memref<2x32x128xf32, #tpu.memory_space<vmem>> -> memref<1x32x128xf32, #tpu.memory_space<vmem>>
      %24 = tpu.memref_squeeze %23 : memref<1x32x128xf32, #tpu.memory_space<vmem>> -> memref<32x128xf32, #tpu.memory_space<vmem>>
      %25 = tpu.memref_slice %arg12[%c1_i32_20, %c0_i32_21] : memref<2x2x!tpu.dma_semaphore, #tpu.memory_space<semaphore_mem>> -> memref<1x1x!tpu.dma_semaphore, #tpu.memory_space<semaphore_mem>>
      %26 = tpu.memref_squeeze %25 : memref<1x1x!tpu.dma_semaphore, #tpu.memory_space<semaphore_mem>> -> memref<!tpu.dma_semaphore, #tpu.memory_space<semaphore_mem>>
      tpu.enqueue_dma source(%22 : memref<32x128xf32, #tpu.memory_space<any>>) target(%24 : memref<32x128xf32, #tpu.memory_space<vmem>>) target_semaphore(%26 : memref<!tpu.dma_semaphore, #tpu.memory_space<semaphore_mem>>)
      %c0_i32_26 = arith.constant 0 : i32
      %c1_i32_27 = arith.constant 1 : i32
      %27 = arith.muli %c0_i32_26, %c1_i32_27 : i32
      %c0_i32_28 = arith.constant 0 : i32
      %28 = arith.addi %c0_i32_28, %27 : i32
      %c2_i32 = arith.constant 2 : i32
      %c0_i32_29 = arith.constant 0 : i32
      %29 = arith.cmpi eq, %c2_i32, %c0_i32_29 : i32
      %c1_i32_30 = arith.constant 1 : i32
      %30 = arith.select %29, %c1_i32_30, %c2_i32 : i32
      %31 = arith.remsi %28, %30 : i32
      %c0_i32_31 = arith.constant 0 : i32
      %32 = arith.cmpi ne, %31, %c0_i32_31 : i32
      %c0_i32_32 = arith.constant 0 : i32
      %33 = arith.cmpi slt, %31, %c0_i32_32 : i32
      %c0_i32_33 = arith.constant 0 : i32
      %34 = arith.cmpi slt, %30, %c0_i32_33 : i32
      %35 = arith.xori %33, %34 : i1
      %36 = arith.andi %35, %32 : i1
      %37 = arith.addi %31, %30 : i32
      %38 = arith.select %36, %37, %31 : i32
      %c1_i32_34 = arith.constant 1 : i32
      %39 = arith.addi %28, %c1_i32_34 : i32
      %c2_i32_35 = arith.constant 2 : i32
      %c0_i32_36 = arith.constant 0 : i32
      %40 = arith.cmpi eq, %c2_i32_35, %c0_i32_36 : i32
      %c1_i32_37 = arith.constant 1 : i32
      %41 = arith.select %40, %c1_i32_37, %c2_i32_35 : i32
      %42 = arith.remsi %39, %41 : i32
      %c0_i32_38 = arith.constant 0 : i32
      %43 = arith.cmpi ne, %42, %c0_i32_38 : i32
      %c0_i32_39 = arith.constant 0 : i32
      %44 = arith.cmpi slt, %42, %c0_i32_39 : i32
      %c0_i32_40 = arith.constant 0 : i32
      %45 = arith.cmpi slt, %41, %c0_i32_40 : i32
      %46 = arith.xori %44, %45 : i1
      %47 = arith.andi %46, %43 : i1
      %48 = arith.addi %42, %41 : i32
      %49 = arith.select %47, %48, %42 : i32
      %c0_i32_41 = arith.constant 0 : i32
      %c0_i32_42 = arith.constant 0 : i32
      %c0_i32_43 = arith.constant 0 : i32
      %50 = tpu.memref_slice %arg1[%c0_i32_42, %c0_i32_43] : memref<32x128xf32, #tpu.memory_space<any>> -> memref<32x128xf32, #tpu.memory_space<any>>
      %c0_i32_44 = arith.constant 0 : i32
      %c0_i32_45 = arith.constant 0 : i32
      %51 = tpu.memref_slice %arg10[%38, %c0_i32_44, %c0_i32_45] : memref<2x32x128xf32, #tpu.memory_space<vmem>> -> memref<1x32x128xf32, #tpu.memory_space<vmem>>
      %52 = tpu.memref_squeeze %51 : memref<1x32x128xf32, #tpu.memory_space<vmem>> -> memref<32x128xf32, #tpu.memory_space<vmem>>
      %53 = tpu.memref_slice %arg12[%c0_i32_41, %38] : memref<2x2x!tpu.dma_semaphore, #tpu.memory_space<semaphore_mem>> -> memref<1x1x!tpu.dma_semaphore, #tpu.memory_space<semaphore_mem>>
      %54 = tpu.memref_squeeze %53 : memref<1x1x!tpu.dma_semaphore, #tpu.memory_space<semaphore_mem>> -> memref<!tpu.dma_semaphore, #tpu.memory_space<semaphore_mem>>
      tpu.wait_dma2 semaphore(%54 : memref<!tpu.dma_semaphore, #tpu.memory_space<semaphore_mem>>) src(%50 : memref<32x128xf32, #tpu.memory_space<any>>) dst(%52 : memref<32x128xf32, #tpu.memory_space<vmem>>)
      %c1_i32_46 = arith.constant 1 : i32
      %c0_i32_47 = arith.constant 0 : i32
      %c0_i32_48 = arith.constant 0 : i32
      %55 = tpu.memref_slice %arg2[%c0_i32_47, %c0_i32_48] : memref<32x128xf32, #tpu.memory_space<any>> -> memref<32x128xf32, #tpu.memory_space<any>>
      %c0_i32_49 = arith.constant 0 : i32
      %c0_i32_50 = arith.constant 0 : i32
      %56 = tpu.memref_slice %arg11[%38, %c0_i32_49, %c0_i32_50] : memref<2x32x128xf32, #tpu.memory_space<vmem>> -> memref<1x32x128xf32, #tpu.memory_space<vmem>>
      %57 = tpu.memref_squeeze %56 : memref<1x32x128xf32, #tpu.memory_space<vmem>> -> memref<32x128xf32, #tpu.memory_space<vmem>>
      %58 = tpu.memref_slice %arg12[%c1_i32_46, %38] : memref<2x2x!tpu.dma_semaphore, #tpu.memory_space<semaphore_mem>> -> memref<1x1x!tpu.dma_semaphore, #tpu.memory_space<semaphore_mem>>
      %59 = tpu.memref_squeeze %58 : memref<1x1x!tpu.dma_semaphore, #tpu.memory_space<semaphore_mem>> -> memref<!tpu.dma_semaphore, #tpu.memory_space<semaphore_mem>>
      tpu.wait_dma2 semaphore(%59 : memref<!tpu.dma_semaphore, #tpu.memory_space<semaphore_mem>>) src(%55 : memref<32x128xf32, #tpu.memory_space<any>>) dst(%57 : memref<32x128xf32, #tpu.memory_space<vmem>>)
      %c1_i32_51 = arith.constant 1 : i32
      %60 = arith.addi %28, %c1_i32_51 : i32
      %c1_i32_52 = arith.constant 1 : i32
      %61 = arith.cmpi slt, %60, %c1_i32_52 : i32
      %62 = arith.extui %61 : i1 to i32
      %c0_i32_53 = arith.constant 0 : i32
      %63 = arith.cmpi ne, %62, %c0_i32_53 : i32
      scf.if %63 {
        %c1_i32_65 = arith.constant 1 : i32
        %79 = arith.addi %28, %c1_i32_65 : i32
        %c32_i32 = arith.constant 32 : i32
        %80 = arith.muli %79, %c32_i32 : i32
        %81 = tpu.assume_multiple %80, 32 : i32
        %c0_i32_66 = arith.constant 0 : i32
        %c0_i32_67 = arith.constant 0 : i32
        %82 = tpu.memref_slice %arg1[%81, %c0_i32_67] : memref<32x128xf32, #tpu.memory_space<any>> -> memref<32x128xf32, #tpu.memory_space<any>>
        %c0_i32_68 = arith.constant 0 : i32
        %c0_i32_69 = arith.constant 0 : i32
        %83 = tpu.memref_slice %arg10[%49, %c0_i32_68, %c0_i32_69] : memref<2x32x128xf32, #tpu.memory_space<vmem>> -> memref<1x32x128xf32, #tpu.memory_space<vmem>>
        %84 = tpu.memref_squeeze %83 : memref<1x32x128xf32, #tpu.memory_space<vmem>> -> memref<32x128xf32, #tpu.memory_space<vmem>>
        %85 = tpu.memref_slice %arg12[%c0_i32_66, %49] : memref<2x2x!tpu.dma_semaphore, #tpu.memory_space<semaphore_mem>> -> memref<1x1x!tpu.dma_semaphore, #tpu.memory_space<semaphore_mem>>
        %86 = tpu.memref_squeeze %85 : memref<1x1x!tpu.dma_semaphore, #tpu.memory_space<semaphore_mem>> -> memref<!tpu.dma_semaphore, #tpu.memory_space<semaphore_mem>>
        tpu.enqueue_dma source(%82 : memref<32x128xf32, #tpu.memory_space<any>>) target(%84 : memref<32x128xf32, #tpu.memory_space<vmem>>) target_semaphore(%86 : memref<!tpu.dma_semaphore, #tpu.memory_space<semaphore_mem>>)
        %c1_i32_70 = arith.constant 1 : i32
        %c0_i32_71 = arith.constant 0 : i32
        %87 = tpu.memref_slice %arg2[%81, %c0_i32_71] : memref<32x128xf32, #tpu.memory_space<any>> -> memref<32x128xf32, #tpu.memory_space<any>>
        %c0_i32_72 = arith.constant 0 : i32
        %c0_i32_73 = arith.constant 0 : i32
        %88 = tpu.memref_slice %arg11[%49, %c0_i32_72, %c0_i32_73] : memref<2x32x128xf32, #tpu.memory_space<vmem>> -> memref<1x32x128xf32, #tpu.memory_space<vmem>>
        %89 = tpu.memref_squeeze %88 : memref<1x32x128xf32, #tpu.memory_space<vmem>> -> memref<32x128xf32, #tpu.memory_space<vmem>>
        %90 = tpu.memref_slice %arg12[%c1_i32_70, %49] : memref<2x2x!tpu.dma_semaphore, #tpu.memory_space<semaphore_mem>> -> memref<1x1x!tpu.dma_semaphore, #tpu.memory_space<semaphore_mem>>
        %91 = tpu.memref_squeeze %90 : memref<1x1x!tpu.dma_semaphore, #tpu.memory_space<semaphore_mem>> -> memref<!tpu.dma_semaphore, #tpu.memory_space<semaphore_mem>>
        tpu.enqueue_dma source(%87 : memref<32x128xf32, #tpu.memory_space<any>>) target(%89 : memref<32x128xf32, #tpu.memory_space<vmem>>) target_semaphore(%91 : memref<!tpu.dma_semaphore, #tpu.memory_space<semaphore_mem>>)
      } else {
      }
      %64 = arith.index_cast %38 : i32 to index
      %c0_54 = arith.constant 0 : index
      %c0_55 = arith.constant 0 : index
      %65 = vector.load %arg10[%64, %c0_54, %c0_55] : memref<2x32x128xf32, #tpu.memory_space<vmem>>, vector<1x32x128xf32>
      %66 = vector.shape_cast %65 : vector<1x32x128xf32> to vector<32x128xf32>
      %67 = arith.index_cast %38 : i32 to index
      %c0_56 = arith.constant 0 : index
      %c0_57 = arith.constant 0 : index
      %68 = vector.load %arg11[%67, %c0_56, %c0_57] : memref<2x32x128xf32, #tpu.memory_space<vmem>>, vector<1x32x128xf32>
      %69 = vector.shape_cast %68 : vector<1x32x128xf32> to vector<32x128xf32>
      %70 = arith.subf %66, %69 : vector<32x128xf32>
      %71 = math.absf %70 : vector<32x128xf32>
      %c0_58 = arith.constant 0 : index
      %c0_59 = arith.constant 0 : index
      %72 = vector.load %arg13[%c0_58, %c0_59] : memref<8x128xf32, #tpu.memory_space<vmem>>, vector<8x128xf32>
      %73 = vector.shape_cast %71 : vector<32x128xf32> to vector<4x8x128xf32>
      %cst_60 = arith.constant dense<0.000000e+00> : vector<8x128xf32>
      %74 = vector.multi_reduction <add>, %73, %cst_60 [0] : vector<4x8x128xf32> to vector<8x128xf32>
      %cst_61 = arith.constant 4.8828125E-4 : f32
      %75 = vector.broadcast %cst_61 : f32 to vector<8x128xf32>
      %76 = arith.mulf %75, %74 : vector<8x128xf32>
      %77 = arith.addf %72, %76 : vector<8x128xf32>
      %c0_62 = arith.constant 0 : index
      %c0_63 = arith.constant 0 : index
      %78 = vector.load %arg13[%c0_62, %c0_63] : memref<8x128xf32, #tpu.memory_space<vmem>>, vector<8x128xf32>
      tpu.vector_store %arg13[%c0_62, %c0_63], %77 {strides = array<i32>} : memref<8x128xf32, #tpu.memory_space<vmem>>, vector<8x128xf32>,
      %c1_i32_64 = arith.constant 1 : i32
    } else {
    }
    %c1_i32 = arith.constant 1 : i32
    %5 = arith.cmpi eq, %arg0, %c1_i32 : i32
    %6 = arith.extui %5 : i1 to i32
    %c0_i32_2 = arith.constant 0 : i32
    %7 = arith.cmpi ne, %6, %c0_i32_2 : i32
    scf.if %7 {
      %c0_i32_12 = arith.constant 0 : i32
      %c0_i32_13 = arith.constant 0 : i32
      %c0_i32_14 = arith.constant 0 : i32
      %c0_i32_15 = arith.constant 0 : i32
      %c0_i32_16 = arith.constant 0 : i32
      %17 = tpu.memref_slice %arg3[%c0_i32_15, %c0_i32_16] : memref<16x128xf32, #tpu.memory_space<any>> -> memref<16x128xf32, #tpu.memory_space<any>>
      %c0_i32_17 = arith.constant 0 : i32
      %c0_i32_18 = arith.constant 0 : i32
      %18 = tpu.memref_slice %arg10[%c0_i32_12, %c0_i32_17, %c0_i32_18] : memref<2x32x128xf32, #tpu.memory_space<vmem>> -> memref<1x16x128xf32, #tpu.memory_space<vmem>>
      %19 = tpu.memref_squeeze %18 : memref<1x16x128xf32, #tpu.memory_space<vmem>> -> memref<16x128xf32, #tpu.memory_space<vmem>>
      %20 = tpu.memref_slice %arg12[%c0_i32_13, %c0_i32_14] : memref<2x2x!tpu.dma_semaphore, #tpu.memory_space<semaphore_mem>> -> memref<1x1x!tpu.dma_semaphore, #tpu.memory_space<semaphore_mem>>
      %21 = tpu.memref_squeeze %20 : memref<1x1x!tpu.dma_semaphore, #tpu.memory_space<semaphore_mem>> -> memref<!tpu.dma_semaphore, #tpu.memory_space<semaphore_mem>>
      tpu.enqueue_dma source(%17 : memref<16x128xf32, #tpu.memory_space<any>>) target(%19 : memref<16x128xf32, #tpu.memory_space<vmem>>) target_semaphore(%21 : memref<!tpu.dma_semaphore, #tpu.memory_space<semaphore_mem>>)
      %c0_i32_19 = arith.constant 0 : i32
      %c1_i32_20 = arith.constant 1 : i32
      %c0_i32_21 = arith.constant 0 : i32
      %c0_i32_22 = arith.constant 0 : i32
      %c0_i32_23 = arith.constant 0 : i32
      %22 = tpu.memref_slice %arg4[%c0_i32_22, %c0_i32_23] : memref<16x128xf32, #tpu.memory_space<any>> -> memref<16x128xf32, #tpu.memory_space<any>>
      %c0_i32_24 = arith.constant 0 : i32
      %c0_i32_25 = arith.constant 0 : i32
      %23 = tpu.memref_slice %arg11[%c0_i32_19, %c0_i32_24, %c0_i32_25] : memref<2x32x128xf32, #tpu.memory_space<vmem>> -> memref<1x16x128xf32, #tpu.memory_space<vmem>>
      %24 = tpu.memref_squeeze %23 : memref<1x16x128xf32, #tpu.memory_space<vmem>> -> memref<16x128xf32, #tpu.memory_space<vmem>>
      %25 = tpu.memref_slice %arg12[%c1_i32_20, %c0_i32_21] : memref<2x2x!tpu.dma_semaphore, #tpu.memory_space<semaphore_mem>> -> memref<1x1x!tpu.dma_semaphore, #tpu.memory_space<semaphore_mem>>
      %26 = tpu.memref_squeeze %25 : memref<1x1x!tpu.dma_semaphore, #tpu.memory_space<semaphore_mem>> -> memref<!tpu.dma_semaphore, #tpu.memory_space<semaphore_mem>>
      tpu.enqueue_dma source(%22 : memref<16x128xf32, #tpu.memory_space<any>>) target(%24 : memref<16x128xf32, #tpu.memory_space<vmem>>) target_semaphore(%26 : memref<!tpu.dma_semaphore, #tpu.memory_space<semaphore_mem>>)
      %c0_i32_26 = arith.constant 0 : i32
      %c0_i32_27 = arith.constant 0 : i32
      %c0_i32_28 = arith.constant 0 : i32
      %c0_i32_29 = arith.constant 0 : i32
      %c0_i32_30 = arith.constant 0 : i32
      %27 = tpu.memref_slice %arg3[%c0_i32_29, %c0_i32_30] : memref<16x128xf32, #tpu.memory_space<any>> -> memref<16x128xf32, #tpu.memory_space<any>>
      %c0_i32_31 = arith.constant 0 : i32
      %c0_i32_32 = arith.constant 0 : i32
      %28 = tpu.memref_slice %arg10[%c0_i32_26, %c0_i32_31, %c0_i32_32] : memref<2x32x128xf32, #tpu.memory_space<vmem>> -> memref<1x16x128xf32, #tpu.memory_space<vmem>>
      %29 = tpu.memref_squeeze %28 : memref<1x16x128xf32, #tpu.memory_space<vmem>> -> memref<16x128xf32, #tpu.memory_space<vmem>>
      %30 = tpu.memref_slice %arg12[%c0_i32_27, %c0_i32_28] : memref<2x2x!tpu.dma_semaphore, #tpu.memory_space<semaphore_mem>> -> memref<1x1x!tpu.dma_semaphore, #tpu.memory_space<semaphore_mem>>
      %31 = tpu.memref_squeeze %30 : memref<1x1x!tpu.dma_semaphore, #tpu.memory_space<semaphore_mem>> -> memref<!tpu.dma_semaphore, #tpu.memory_space<semaphore_mem>>
      tpu.wait_dma2 semaphore(%31 : memref<!tpu.dma_semaphore, #tpu.memory_space<semaphore_mem>>) src(%27 : memref<16x128xf32, #tpu.memory_space<any>>) dst(%29 : memref<16x128xf32, #tpu.memory_space<vmem>>)
      %c0_i32_33 = arith.constant 0 : i32
      %c1_i32_34 = arith.constant 1 : i32
      %c0_i32_35 = arith.constant 0 : i32
      %c0_i32_36 = arith.constant 0 : i32
      %c0_i32_37 = arith.constant 0 : i32
      %32 = tpu.memref_slice %arg4[%c0_i32_36, %c0_i32_37] : memref<16x128xf32, #tpu.memory_space<any>> -> memref<16x128xf32, #tpu.memory_space<any>>
      %c0_i32_38 = arith.constant 0 : i32
      %c0_i32_39 = arith.constant 0 : i32
      %33 = tpu.memref_slice %arg11[%c0_i32_33, %c0_i32_38, %c0_i32_39] : memref<2x32x128xf32, #tpu.memory_space<vmem>> -> memref<1x16x128xf32, #tpu.memory_space<vmem>>
      %34 = tpu.memref_squeeze %33 : memref<1x16x128xf32, #tpu.memory_space<vmem>> -> memref<16x128xf32, #tpu.memory_space<vmem>>
      %35 = tpu.memref_slice %arg12[%c1_i32_34, %c0_i32_35] : memref<2x2x!tpu.dma_semaphore, #tpu.memory_space<semaphore_mem>> -> memref<1x1x!tpu.dma_semaphore, #tpu.memory_space<semaphore_mem>>
      %36 = tpu.memref_squeeze %35 : memref<1x1x!tpu.dma_semaphore, #tpu.memory_space<semaphore_mem>> -> memref<!tpu.dma_semaphore, #tpu.memory_space<semaphore_mem>>
      tpu.wait_dma2 semaphore(%36 : memref<!tpu.dma_semaphore, #tpu.memory_space<semaphore_mem>>) src(%32 : memref<16x128xf32, #tpu.memory_space<any>>) dst(%34 : memref<16x128xf32, #tpu.memory_space<vmem>>)
      %c0_40 = arith.constant 0 : index
      %c0_41 = arith.constant 0 : index
      %c0_42 = arith.constant 0 : index
      %37 = vector.load %arg10[%c0_40, %c0_41, %c0_42] : memref<2x32x128xf32, #tpu.memory_space<vmem>>, vector<1x16x128xf32>
      %38 = vector.shape_cast %37 : vector<1x16x128xf32> to vector<16x128xf32>
      %c0_43 = arith.constant 0 : index
      %c0_44 = arith.constant 0 : index
      %c0_45 = arith.constant 0 : index
      %39 = vector.load %arg11[%c0_43, %c0_44, %c0_45] : memref<2x32x128xf32, #tpu.memory_space<vmem>>, vector<1x16x128xf32>
      %40 = vector.shape_cast %39 : vector<1x16x128xf32> to vector<16x128xf32>
      %41 = arith.subf %38, %40 : vector<16x128xf32>
      %42 = math.absf %41 : vector<16x128xf32>
      %c0_46 = arith.constant 0 : index
      %c0_47 = arith.constant 0 : index
      %43 = vector.load %arg13[%c0_46, %c0_47] : memref<8x128xf32, #tpu.memory_space<vmem>>, vector<8x128xf32>
      %44 = vector.shape_cast %42 : vector<16x128xf32> to vector<2x8x128xf32>
      %cst_48 = arith.constant dense<0.000000e+00> : vector<8x128xf32>
      %45 = vector.multi_reduction <add>, %44, %cst_48 [0] : vector<2x8x128xf32> to vector<8x128xf32>
      %cst_49 = arith.constant 9.765625E-4 : f32
      %46 = vector.broadcast %cst_49 : f32 to vector<8x128xf32>
      %47 = arith.mulf %46, %45 : vector<8x128xf32>
      %48 = arith.addf %43, %47 : vector<8x128xf32>
      %c0_50 = arith.constant 0 : index
      %c0_51 = arith.constant 0 : index
      %49 = vector.load %arg13[%c0_50, %c0_51] : memref<8x128xf32, #tpu.memory_space<vmem>>, vector<8x128xf32>
      tpu.vector_store %arg13[%c0_50, %c0_51], %48 {strides = array<i32>} : memref<8x128xf32, #tpu.memory_space<vmem>>, vector<8x128xf32>,
    } else {
    }
    %c1_i32_3 = arith.constant 1 : i32
    %8 = arith.cmpi eq, %arg0, %c1_i32_3 : i32
    %9 = arith.extui %8 : i1 to i32
    %c0_i32_4 = arith.constant 0 : i32
    %10 = arith.cmpi ne, %9, %c0_i32_4 : i32
    scf.if %10 {
      %c0_i32_12 = arith.constant 0 : i32
      %c0_i32_13 = arith.constant 0 : i32
      %c0_i32_14 = arith.constant 0 : i32
      %c0_i32_15 = arith.constant 0 : i32
      %c0_i32_16 = arith.constant 0 : i32
      %17 = tpu.memref_slice %arg5[%c0_i32_15, %c0_i32_16] : memref<12x128xf32, #tpu.memory_space<any>> -> memref<12x128xf32, #tpu.memory_space<any>>
      %c0_i32_17 = arith.constant 0 : i32
      %c0_i32_18 = arith.constant 0 : i32
      %18 = tpu.memref_slice %arg10[%c0_i32_12, %c0_i32_17, %c0_i32_18] : memref<2x32x128xf32, #tpu.memory_space<vmem>> -> memref<1x12x128xf32, #tpu.memory_space<vmem>>
      %19 = tpu.memref_squeeze %18 : memref<1x12x128xf32, #tpu.memory_space<vmem>> -> memref<12x128xf32, #tpu.memory_space<vmem>>
      %20 = tpu.memref_slice %arg12[%c0_i32_13, %c0_i32_14] : memref<2x2x!tpu.dma_semaphore, #tpu.memory_space<semaphore_mem>> -> memref<1x1x!tpu.dma_semaphore, #tpu.memory_space<semaphore_mem>>
      %21 = tpu.memref_squeeze %20 : memref<1x1x!tpu.dma_semaphore, #tpu.memory_space<semaphore_mem>> -> memref<!tpu.dma_semaphore, #tpu.memory_space<semaphore_mem>>
      tpu.enqueue_dma source(%17 : memref<12x128xf32, #tpu.memory_space<any>>) target(%19 : memref<12x128xf32, #tpu.memory_space<vmem>>) target_semaphore(%21 : memref<!tpu.dma_semaphore, #tpu.memory_space<semaphore_mem>>)
      %c0_i32_19 = arith.constant 0 : i32
      %c1_i32_20 = arith.constant 1 : i32
      %c0_i32_21 = arith.constant 0 : i32
      %c0_i32_22 = arith.constant 0 : i32
      %c0_i32_23 = arith.constant 0 : i32
      %22 = tpu.memref_slice %arg6[%c0_i32_22, %c0_i32_23] : memref<12x128xf32, #tpu.memory_space<any>> -> memref<12x128xf32, #tpu.memory_space<any>>
      %c0_i32_24 = arith.constant 0 : i32
      %c0_i32_25 = arith.constant 0 : i32
      %23 = tpu.memref_slice %arg11[%c0_i32_19, %c0_i32_24, %c0_i32_25] : memref<2x32x128xf32, #tpu.memory_space<vmem>> -> memref<1x12x128xf32, #tpu.memory_space<vmem>>
      %24 = tpu.memref_squeeze %23 : memref<1x12x128xf32, #tpu.memory_space<vmem>> -> memref<12x128xf32, #tpu.memory_space<vmem>>
      %25 = tpu.memref_slice %arg12[%c1_i32_20, %c0_i32_21] : memref<2x2x!tpu.dma_semaphore, #tpu.memory_space<semaphore_mem>> -> memref<1x1x!tpu.dma_semaphore, #tpu.memory_space<semaphore_mem>>
      %26 = tpu.memref_squeeze %25 : memref<1x1x!tpu.dma_semaphore, #tpu.memory_space<semaphore_mem>> -> memref<!tpu.dma_semaphore, #tpu.memory_space<semaphore_mem>>
      tpu.enqueue_dma source(%22 : memref<12x128xf32, #tpu.memory_space<any>>) target(%24 : memref<12x128xf32, #tpu.memory_space<vmem>>) target_semaphore(%26 : memref<!tpu.dma_semaphore, #tpu.memory_space<semaphore_mem>>)
      %c0_i32_26 = arith.constant 0 : i32
      %c0_i32_27 = arith.constant 0 : i32
      %c0_i32_28 = arith.constant 0 : i32
      %c0_i32_29 = arith.constant 0 : i32
      %c0_i32_30 = arith.constant 0 : i32
      %27 = tpu.memref_slice %arg5[%c0_i32_29, %c0_i32_30] : memref<12x128xf32, #tpu.memory_space<any>> -> memref<12x128xf32, #tpu.memory_space<any>>
      %c0_i32_31 = arith.constant 0 : i32
      %c0_i32_32 = arith.constant 0 : i32
      %28 = tpu.memref_slice %arg10[%c0_i32_26, %c0_i32_31, %c0_i32_32] : memref<2x32x128xf32, #tpu.memory_space<vmem>> -> memref<1x12x128xf32, #tpu.memory_space<vmem>>
      %29 = tpu.memref_squeeze %28 : memref<1x12x128xf32, #tpu.memory_space<vmem>> -> memref<12x128xf32, #tpu.memory_space<vmem>>
      %30 = tpu.memref_slice %arg12[%c0_i32_27, %c0_i32_28] : memref<2x2x!tpu.dma_semaphore, #tpu.memory_space<semaphore_mem>> -> memref<1x1x!tpu.dma_semaphore, #tpu.memory_space<semaphore_mem>>
      %31 = tpu.memref_squeeze %30 : memref<1x1x!tpu.dma_semaphore, #tpu.memory_space<semaphore_mem>> -> memref<!tpu.dma_semaphore, #tpu.memory_space<semaphore_mem>>
      tpu.wait_dma2 semaphore(%31 : memref<!tpu.dma_semaphore, #tpu.memory_space<semaphore_mem>>) src(%27 : memref<12x128xf32, #tpu.memory_space<any>>) dst(%29 : memref<12x128xf32, #tpu.memory_space<vmem>>)
      %c0_i32_33 = arith.constant 0 : i32
      %c1_i32_34 = arith.constant 1 : i32
      %c0_i32_35 = arith.constant 0 : i32
      %c0_i32_36 = arith.constant 0 : i32
      %c0_i32_37 = arith.constant 0 : i32
      %32 = tpu.memref_slice %arg6[%c0_i32_36, %c0_i32_37] : memref<12x128xf32, #tpu.memory_space<any>> -> memref<12x128xf32, #tpu.memory_space<any>>
      %c0_i32_38 = arith.constant 0 : i32
      %c0_i32_39 = arith.constant 0 : i32
      %33 = tpu.memref_slice %arg11[%c0_i32_33, %c0_i32_38, %c0_i32_39] : memref<2x32x128xf32, #tpu.memory_space<vmem>> -> memref<1x12x128xf32, #tpu.memory_space<vmem>>
      %34 = tpu.memref_squeeze %33 : memref<1x12x128xf32, #tpu.memory_space<vmem>> -> memref<12x128xf32, #tpu.memory_space<vmem>>
      %35 = tpu.memref_slice %arg12[%c1_i32_34, %c0_i32_35] : memref<2x2x!tpu.dma_semaphore, #tpu.memory_space<semaphore_mem>> -> memref<1x1x!tpu.dma_semaphore, #tpu.memory_space<semaphore_mem>>
      %36 = tpu.memref_squeeze %35 : memref<1x1x!tpu.dma_semaphore, #tpu.memory_space<semaphore_mem>> -> memref<!tpu.dma_semaphore, #tpu.memory_space<semaphore_mem>>
      tpu.wait_dma2 semaphore(%36 : memref<!tpu.dma_semaphore, #tpu.memory_space<semaphore_mem>>) src(%32 : memref<12x128xf32, #tpu.memory_space<any>>) dst(%34 : memref<12x128xf32, #tpu.memory_space<vmem>>)
      %c0_40 = arith.constant 0 : index
      %c0_41 = arith.constant 0 : index
      %c0_42 = arith.constant 0 : index
      %37 = vector.load %arg10[%c0_40, %c0_41, %c0_42] : memref<2x32x128xf32, #tpu.memory_space<vmem>>, vector<1x16x128xf32>
      %38 = vector.shape_cast %37 : vector<1x16x128xf32> to vector<16x128xf32>
      %c0_43 = arith.constant 0 : index
      %c0_44 = arith.constant 0 : index
      %c0_45 = arith.constant 0 : index
      %39 = vector.load %arg11[%c0_43, %c0_44, %c0_45] : memref<2x32x128xf32, #tpu.memory_space<vmem>>, vector<1x16x128xf32>
      %40 = vector.shape_cast %39 : vector<1x16x128xf32> to vector<16x128xf32>
      %41 = arith.subf %38, %40 : vector<16x128xf32>
      %42 = math.absf %41 : vector<16x128xf32>
      %43 = tpu.iota {dimensions = array<i32: 0>} : vector<16x128xi32>
      %c12_i32 = arith.constant 12 : i32
      %44 = vector.broadcast %c12_i32 : i32 to vector<16x128xi32>
      %45 = arith.cmpi slt, %43, %44 : vector<16x128xi32>
      %cst_46 = arith.constant 0.000000e+00 : f32
      %46 = vector.broadcast %cst_46 : f32 to vector<16x128xf32>
      %47 = arith.select %45, %42, %46 : vector<16x128xi1>, vector<16x128xf32>
      %c0_47 = arith.constant 0 : index
      %c0_48 = arith.constant 0 : index
      %48 = vector.load %arg13[%c0_47, %c0_48] : memref<8x128xf32, #tpu.memory_space<vmem>>, vector<8x128xf32>
      %49 = vector.shape_cast %47 : vector<16x128xf32> to vector<2x8x128xf32>
      %cst_49 = arith.constant dense<0.000000e+00> : vector<8x128xf32>
      %50 = vector.multi_reduction <add>, %49, %cst_49 [0] : vector<2x8x128xf32> to vector<8x128xf32>
      %cst_50 = arith.constant 0.00130208337 : f32
      %51 = vector.broadcast %cst_50 : f32 to vector<8x128xf32>
      %52 = arith.mulf %51, %50 : vector<8x128xf32>
      %53 = arith.addf %48, %52 : vector<8x128xf32>
      %c0_51 = arith.constant 0 : index
      %c0_52 = arith.constant 0 : index
      %54 = vector.load %arg13[%c0_51, %c0_52] : memref<8x128xf32, #tpu.memory_space<vmem>>, vector<8x128xf32>
      tpu.vector_store %arg13[%c0_51, %c0_52], %53 {strides = array<i32>} : memref<8x128xf32, #tpu.memory_space<vmem>>, vector<8x128xf32>,
    } else {
    }
    %c1_i32_5 = arith.constant 1 : i32
    %11 = arith.cmpi eq, %arg0, %c1_i32_5 : i32
    %12 = arith.extui %11 : i1 to i32
    %c0_i32_6 = arith.constant 0 : i32
    %13 = arith.cmpi ne, %12, %c0_i32_6 : i32
    scf.if %13 {
      %c0_i32_12 = arith.constant 0 : i32
      %c0_i32_13 = arith.constant 0 : i32
      %c0_i32_14 = arith.constant 0 : i32
      %c0_i32_15 = arith.constant 0 : i32
      %c0_i32_16 = arith.constant 0 : i32
      %17 = tpu.memref_slice %arg7[%c0_i32_15, %c0_i32_16] : memref<6x128xf32, #tpu.memory_space<any>> -> memref<6x128xf32, #tpu.memory_space<any>>
      %c0_i32_17 = arith.constant 0 : i32
      %c0_i32_18 = arith.constant 0 : i32
      %18 = tpu.memref_slice %arg10[%c0_i32_12, %c0_i32_17, %c0_i32_18] : memref<2x32x128xf32, #tpu.memory_space<vmem>> -> memref<1x6x128xf32, #tpu.memory_space<vmem>>
      %19 = tpu.memref_squeeze %18 : memref<1x6x128xf32, #tpu.memory_space<vmem>> -> memref<6x128xf32, #tpu.memory_space<vmem>>
      %20 = tpu.memref_slice %arg12[%c0_i32_13, %c0_i32_14] : memref<2x2x!tpu.dma_semaphore, #tpu.memory_space<semaphore_mem>> -> memref<1x1x!tpu.dma_semaphore, #tpu.memory_space<semaphore_mem>>
      %21 = tpu.memref_squeeze %20 : memref<1x1x!tpu.dma_semaphore, #tpu.memory_space<semaphore_mem>> -> memref<!tpu.dma_semaphore, #tpu.memory_space<semaphore_mem>>
      tpu.enqueue_dma source(%17 : memref<6x128xf32, #tpu.memory_space<any>>) target(%19 : memref<6x128xf32, #tpu.memory_space<vmem>>) target_semaphore(%21 : memref<!tpu.dma_semaphore, #tpu.memory_space<semaphore_mem>>)
      %c0_i32_19 = arith.constant 0 : i32
      %c1_i32_20 = arith.constant 1 : i32
      %c0_i32_21 = arith.constant 0 : i32
      %c0_i32_22 = arith.constant 0 : i32
      %c0_i32_23 = arith.constant 0 : i32
      %22 = tpu.memref_slice %arg8[%c0_i32_22, %c0_i32_23] : memref<6x128xf32, #tpu.memory_space<any>> -> memref<6x128xf32, #tpu.memory_space<any>>
      %c0_i32_24 = arith.constant 0 : i32
      %c0_i32_25 = arith.constant 0 : i32
      %23 = tpu.memref_slice %arg11[%c0_i32_19, %c0_i32_24, %c0_i32_25] : memref<2x32x128xf32, #tpu.memory_space<vmem>> -> memref<1x6x128xf32, #tpu.memory_space<vmem>>
      %24 = tpu.memref_squeeze %23 : memref<1x6x128xf32, #tpu.memory_space<vmem>> -> memref<6x128xf32, #tpu.memory_space<vmem>>
      %25 = tpu.memref_slice %arg12[%c1_i32_20, %c0_i32_21] : memref<2x2x!tpu.dma_semaphore, #tpu.memory_space<semaphore_mem>> -> memref<1x1x!tpu.dma_semaphore, #tpu.memory_space<semaphore_mem>>
      %26 = tpu.memref_squeeze %25 : memref<1x1x!tpu.dma_semaphore, #tpu.memory_space<semaphore_mem>> -> memref<!tpu.dma_semaphore, #tpu.memory_space<semaphore_mem>>
      tpu.enqueue_dma source(%22 : memref<6x128xf32, #tpu.memory_space<any>>) target(%24 : memref<6x128xf32, #tpu.memory_space<vmem>>) target_semaphore(%26 : memref<!tpu.dma_semaphore, #tpu.memory_space<semaphore_mem>>)
      %c0_i32_26 = arith.constant 0 : i32
      %c0_i32_27 = arith.constant 0 : i32
      %c0_i32_28 = arith.constant 0 : i32
      %c0_i32_29 = arith.constant 0 : i32
      %c0_i32_30 = arith.constant 0 : i32
      %27 = tpu.memref_slice %arg7[%c0_i32_29, %c0_i32_30] : memref<6x128xf32, #tpu.memory_space<any>> -> memref<6x128xf32, #tpu.memory_space<any>>
      %c0_i32_31 = arith.constant 0 : i32
      %c0_i32_32 = arith.constant 0 : i32
      %28 = tpu.memref_slice %arg10[%c0_i32_26, %c0_i32_31, %c0_i32_32] : memref<2x32x128xf32, #tpu.memory_space<vmem>> -> memref<1x6x128xf32, #tpu.memory_space<vmem>>
      %29 = tpu.memref_squeeze %28 : memref<1x6x128xf32, #tpu.memory_space<vmem>> -> memref<6x128xf32, #tpu.memory_space<vmem>>
      %30 = tpu.memref_slice %arg12[%c0_i32_27, %c0_i32_28] : memref<2x2x!tpu.dma_semaphore, #tpu.memory_space<semaphore_mem>> -> memref<1x1x!tpu.dma_semaphore, #tpu.memory_space<semaphore_mem>>
      %31 = tpu.memref_squeeze %30 : memref<1x1x!tpu.dma_semaphore, #tpu.memory_space<semaphore_mem>> -> memref<!tpu.dma_semaphore, #tpu.memory_space<semaphore_mem>>
      tpu.wait_dma2 semaphore(%31 : memref<!tpu.dma_semaphore, #tpu.memory_space<semaphore_mem>>) src(%27 : memref<6x128xf32, #tpu.memory_space<any>>) dst(%29 : memref<6x128xf32, #tpu.memory_space<vmem>>)
      %c0_i32_33 = arith.constant 0 : i32
      %c1_i32_34 = arith.constant 1 : i32
      %c0_i32_35 = arith.constant 0 : i32
      %c0_i32_36 = arith.constant 0 : i32
      %c0_i32_37 = arith.constant 0 : i32
      %32 = tpu.memref_slice %arg8[%c0_i32_36, %c0_i32_37] : memref<6x128xf32, #tpu.memory_space<any>> -> memref<6x128xf32, #tpu.memory_space<any>>
      %c0_i32_38 = arith.constant 0 : i32
      %c0_i32_39 = arith.constant 0 : i32
      %33 = tpu.memref_slice %arg11[%c0_i32_33, %c0_i32_38, %c0_i32_39] : memref<2x32x128xf32, #tpu.memory_space<vmem>> -> memref<1x6x128xf32, #tpu.memory_space<vmem>>
      %34 = tpu.memref_squeeze %33 : memref<1x6x128xf32, #tpu.memory_space<vmem>> -> memref<6x128xf32, #tpu.memory_space<vmem>>
      %35 = tpu.memref_slice %arg12[%c1_i32_34, %c0_i32_35] : memref<2x2x!tpu.dma_semaphore, #tpu.memory_space<semaphore_mem>> -> memref<1x1x!tpu.dma_semaphore, #tpu.memory_space<semaphore_mem>>
      %36 = tpu.memref_squeeze %35 : memref<1x1x!tpu.dma_semaphore, #tpu.memory_space<semaphore_mem>> -> memref<!tpu.dma_semaphore, #tpu.memory_space<semaphore_mem>>
      tpu.wait_dma2 semaphore(%36 : memref<!tpu.dma_semaphore, #tpu.memory_space<semaphore_mem>>) src(%32 : memref<6x128xf32, #tpu.memory_space<any>>) dst(%34 : memref<6x128xf32, #tpu.memory_space<vmem>>)
      %c0_40 = arith.constant 0 : index
      %c0_41 = arith.constant 0 : index
      %c0_42 = arith.constant 0 : index
      %37 = vector.load %arg10[%c0_40, %c0_41, %c0_42] : memref<2x32x128xf32, #tpu.memory_space<vmem>>, vector<1x8x128xf32>
      %38 = vector.shape_cast %37 : vector<1x8x128xf32> to vector<8x128xf32>
      %c0_43 = arith.constant 0 : index
      %c0_44 = arith.constant 0 : index
      %c0_45 = arith.constant 0 : index
      %39 = vector.load %arg11[%c0_43, %c0_44, %c0_45] : memref<2x32x128xf32, #tpu.memory_space<vmem>>, vector<1x8x128xf32>
      %40 = vector.shape_cast %39 : vector<1x8x128xf32> to vector<8x128xf32>
      %41 = arith.subf %38, %40 : vector<8x128xf32>
      %42 = math.absf %41 : vector<8x128xf32>
      %43 = tpu.iota {dimensions = array<i32: 0>} : vector<8x128xi32>
      %c6_i32 = arith.constant 6 : i32
      %44 = vector.broadcast %c6_i32 : i32 to vector<8x128xi32>
      %45 = arith.cmpi slt, %43, %44 : vector<8x128xi32>
      %cst_46 = arith.constant 0.000000e+00 : f32
      %46 = vector.broadcast %cst_46 : f32 to vector<8x128xf32>
      %47 = arith.select %45, %42, %46 : vector<8x128xi1>, vector<8x128xf32>
      %c0_47 = arith.constant 0 : index
      %c0_48 = arith.constant 0 : index
      %48 = vector.load %arg13[%c0_47, %c0_48] : memref<8x128xf32, #tpu.memory_space<vmem>>, vector<8x128xf32>
      %49 = vector.shape_cast %47 : vector<8x128xf32> to vector<1x8x128xf32>
      %cst_49 = arith.constant dense<0.000000e+00> : vector<8x128xf32>
      %50 = vector.multi_reduction <add>, %49, %cst_49 [0] : vector<1x8x128xf32> to vector<8x128xf32>
      %cst_50 = arith.constant 0.00277777785 : f32
      %51 = vector.broadcast %cst_50 : f32 to vector<8x128xf32>
      %52 = arith.mulf %51, %50 : vector<8x128xf32>
      %53 = arith.addf %48, %52 : vector<8x128xf32>
      %c0_51 = arith.constant 0 : index
      %c0_52 = arith.constant 0 : index
      %54 = vector.load %arg13[%c0_51, %c0_52] : memref<8x128xf32, #tpu.memory_space<vmem>>, vector<8x128xf32>
      tpu.vector_store %arg13[%c0_51, %c0_52], %53 {strides = array<i32>} : memref<8x128xf32, #tpu.memory_space<vmem>>, vector<8x128xf32>,
    } else {
    }
    %c0_7 = arith.constant 0 : index
    %c0_8 = arith.constant 0 : index
    %14 = vector.load %arg13[%c0_7, %c0_8] : memref<8x128xf32, #tpu.memory_space<vmem>>, vector<8x128xf32>
    %15 = vector.shape_cast %14 : vector<8x128xf32> to vector<1x8x128xf32>
    %c0_9 = arith.constant 0 : index
    %c0_10 = arith.constant 0 : index
    %c0_11 = arith.constant 0 : index
    %16 = vector.load %arg9[%c0_9, %c0_10, %c0_11] : memref<1x8x128xf32, #tpu.memory_space<vmem>>, vector<1x8x128xf32>
    tpu.vector_store %arg9[%c0_9, %c0_10, %c0_11], %15 {strides = array<i32>} : memref<1x8x128xf32, #tpu.memory_space<vmem>>, vector<1x8x128xf32>,
    return
  }
  func.func @transform_8(%arg0: i32) -> (i32, i32, i32) {
    %c0_i32 = arith.constant 0 : i32
    %c0_i32_0 = arith.constant 0 : i32
    %c0_i32_1 = arith.constant 0 : i32
    return %arg0, %c0_i32, %c0_i32_0 : i32, i32, i32
  }
}

</mosaic_0001>

<llo_original>
// kernel: tpu_custom_call.1
$region0: #{tpu_custom_call.1}
  #allocation0 [shape = 'u32[]', space=smem, size = 0x4, offset = 0x4, fixed_abs, tag = 'smem constant byte address 0x4 - core index']
  #allocation1 [shape = 'u32[72,128]{1,0:T(1,128)}', space=vmem, size = 0x9000, scoped, tag = 'internal scratch']
  #allocation2 [shape = 'f32[2,32,128]{2,1,0:T(8,128)}', space=vmem, size = 0x8000, scoped, tag = 'scratch operand']
  #allocation3 [shape = 'f32[2,32,128]{2,1,0:T(8,128)}', space=vmem, size = 0x8000, scoped, tag = 'scratch operand']
  #allocation4 [shape = 's32[4]{0}', space=sflag, size = 0x10, scoped, tag = 'scratch operand']
  #allocation5 [shape = 'f32[8,128]{1,0:T(8,128)}', space=vmem, size = 0x1000, scoped, tag = 'scratch operand']
  #allocation8 [shape = 's32[]', space=sflag, size = 0x4, offset = 0, fixed_abs, tag = 'sflag constant byte address 0x0 - dummy sync flag']
  #allocation9 [shape = 's32[]', space=sflag, size = 0x4, offset = 0, fixed_abs, tag = 'sflag constant byte address 0x0 - dummy sync flag']
  #allocation10 [shape = 'u32[]', space=smem, size = 0x4, offset = 0x44, fixed_abs, tag = 'smem constant byte address 0x44 - assertion arg 0']
  #allocation11 [shape = 'u32[]', space=smem, size = 0x4, offset = 0x48, fixed_abs, tag = 'smem constant byte address 0x48 - assertion arg 1']
  #allocation12 [shape = 's32[]', space=sflag, size = 0x4, offset = 0, fixed_abs, tag = 'sflag constant byte address 0x0 - dummy sync flag']
  #allocation13 [shape = 's32[]', space=sflag, size = 0x4, offset = 0, fixed_abs, tag = 'sflag constant byte address 0x0 - dummy sync flag']
  #allocation14 [shape = 's32[]', space=sflag, size = 0x4, offset = 0, fixed_abs, tag = 'sflag constant byte address 0x0 - dummy sync flag']
  #allocation15 [shape = 's32[]', space=sflag, size = 0x4, offset = 0, fixed_abs, tag = 'sflag constant byte address 0x0 - dummy sync flag']
  #allocation16 [shape = 's32[]', space=sflag, size = 0x4, offset = 0, fixed_abs, tag = 'sflag constant byte address 0x0 - dummy sync flag']
  #allocation17 [shape = 's32[]', space=sflag, size = 0x4, offset = 0, fixed_abs, tag = 'sflag constant byte address 0x0 - dummy sync flag']
  #allocation18 [shape = 's32[]', space=sflag, size = 0x4, offset = 0, fixed_abs, tag = 'sflag constant byte address 0x0 - dummy sync flag']
  #allocation19 [shape = 's32[]', space=sflag, size = 0x4, offset = 0, fixed_abs, tag = 'sflag constant byte address 0x0 - dummy sync flag']
  #allocation20 [shape = 's32[]', space=sflag, size = 0x4, offset = 0, fixed_abs, tag = 'sflag constant byte address 0x0 - dummy sync flag']
  #allocation21 [shape = 's32[]', space=sflag, size = 0x4, offset = 0, fixed_abs, tag = 'sflag constant byte address 0x0 - dummy sync flag']
  #allocation22 [shape = 's32[]', space=sflag, size = 0x4, offset = 0, fixed_abs, tag = 'sflag constant byte address 0x0 - dummy sync flag']
  #allocation23 [shape = 's32[]', space=sflag, size = 0x4, offset = 0, fixed_abs, tag = 'sflag constant byte address 0x0 - dummy sync flag']
  #allocation24 [shape = 's32[]', space=sflag, size = 0x4, offset = 0, fixed_abs, tag = 'sflag constant byte address 0x0 - dummy sync flag']
  #allocation25 [shape = 's32[]', space=sflag, size = 0x4, offset = 0, fixed_abs, tag = 'sflag constant byte address 0x0 - dummy sync flag']
  %s0 = inlined_call_operand.hbm [shape: f32[32,128], index: 0, kind: input, shape index: {}]
  %s1 = inlined_call_operand.hbm [shape: f32[32,128], index: 1, kind: input, shape index: {}]
  %s2 = inlined_call_operand.hbm [shape: f32[16,128], index: 2, kind: input, shape index: {}]
  %s3 = inlined_call_operand.hbm [shape: f32[16,128], index: 3, kind: input, shape index: {}]
  %s4 = inlined_call_operand.hbm [shape: f32[12,128], index: 4, kind: input, shape index: {}]
  %s5 = inlined_call_operand.hbm [shape: f32[12,128], index: 5, kind: input, shape index: {}]
  %s6 = inlined_call_operand.hbm [shape: f32[6,128], index: 6, kind: input, shape index: {}]
  %s7 = inlined_call_operand.hbm [shape: f32[6,128], index: 7, kind: input, shape index: {}]
  %s8 = inlined_call_operand.hbm [shape: f32[2,8,128], index: 8, kind: output, shape index: {}]
  %s9 = sld [smem:[#allocation0]]
  $region65: #{tpu_custom_call.1} parent=0
    _
  %s11 = ssub.s32 1, %s9
  %s12 = scalar_select 0, %s11, %s9
  $region1: #{tpu_custom_call.1} parent=0
    #allocation6 [shape = 'u8[8192]{0}', space=vmem, size = 0x2000, scoped, tag = 'output window, operand 0']
    #allocation7 [shape = 's32[2]{0}', space=sflag, size = 0x8, scoped, tag = 'scoped memory for tpu_custom_call.1']
    %13 = vsyncpa [#allocation7], 0
    %s14 = scalar_lea.sflag [#allocation7], 1
    %15 = vsyncpa %s14, 0
    loop: start=0, step=1, limit=3
    $region2: #{tpu_custom_call.1} parent=1 // loop_pre_header
      _
    $region3: #{tpu_custom_call.1} parent=1 // loop_header
      %s17 = sphi 0, %s21
      %p18 = scmp.ge.s32.totalorder %s17, 3
      %s26 = sphi 0, %s28
      %s29 = sphi 0, %s26
      %s39 = sphi 0, %s29
    $region4: #{tpu_custom_call.1} parent=1 // loop_header_branch
      %20 = sbr.rel (%p18) target = $region8
    $region5: #{tpu_custom_call.1} parent=1 // loop_body
      %s22 = ssub.s32 %s17, 1
      %s23 = sadd.s32 %s17, 1
      %s24 = ssub.s32 %s17, %s23
      %p25 = scmp.eq.s32.totalorder %s24, 0
      %s27 = sadd.s32 %s26, 1
      %s28 = scalar_select %p25, %s26, %s27
      %p30 = pneg %p25
      %p31 = scmp.eq.s32.totalorder %s17, 1
      %p32 = por %p30, %p31
      %p33 = scmp.ne.s32.totalorder %s26, %s29
      %p34 = scmp.eq.s32.totalorder %s17, 0
      %p35 = por %p33, %p34
      %p36 = scmp.ne.s32.totalorder %s26, %s29
      %p37 = scmp.eq.s32.totalorder %s22, 1
      %p38 = por %p36, %p37
      %p40 = scmp.ne.s32.totalorder %s29, %s39
      %p41 = scmp.eq.s32.totalorder %s22, 0
      %p42 = por %p40, %p41
      %p43 = scmp.lt.s32.totalorder %s17, 2
      // Predicated region
      $region9: #{tpu_custom_call.1} parent=5 // pred_check
        %p44 = pneg %p43
      $region10: #{tpu_custom_call.1} parent=5 // pred_check_branch
        %46 = sbr.rel (%p44) target = $region12
      $region11: #{tpu_custom_call.1} parent=5 // pred_region
        %p47 = pneg %p35
        %p48 = pneg %p32
        %s49 = sand.u32 %s26, 1
        %s50 = scalar_lea.sflag [#allocation7], %s49
        %s51 = sand.u32 %s26, 1
        %s52 = smul.addr %s51, 8
        %s53 = scalar_lea.vmem [#allocation6], %s52
        %54 = vst [vmem:[#allocation5] sm:$0xff] 0.0
        %p55 = scmp.eq.s32.totalorder %s17, 0
        // Predicated region
        $region13: #{tpu_custom_call.1} parent=11 // pred_check
          %p56 = pneg %p55
        $region14: #{tpu_custom_call.1} parent=11 // pred_check_branch
          %58 = sbr.rel (%p56) target = $region16
        $region15: #{tpu_custom_call.1} parent=11 // pred_region
          // Predicated region
          $region17: #{tpu_custom_call.1} parent=15 // pred_check
            _
          $region18: #{tpu_custom_call.1} parent=15 // pred_check_branch
            %60 = sbr.rel target = $region20
          $region19: #{tpu_custom_call.1} parent=15 // pred_region
            %61 = sst [smem:[#allocation10]] [#allocation9]
            %62 = sst [smem:[#allocation11]] [#allocation8]
          $region20: #{tpu_custom_call.1} parent=15 // pred_fallthru
            _
          %64 = shalt.err (0)
          %s66 = sshll.u32 %s0, 4
          %s67 = int_to_ptr.hbm [resolvable:$true] %s66
          %s68 = sshll.u32 [#allocation2], 4
          %s69 = int_to_ptr.vmem [resolvable:$true] %s68
          %71 = dma.hbm_to_vmem [thread:$0]  %s67, 512, %s69, [#allocation4]
          %s72 = scalar_lea.sflag [#allocation4], 2
          // Predicated region
          $region21: #{tpu_custom_call.1} parent=15 // pred_check
            _
          $region22: #{tpu_custom_call.1} parent=15 // pred_check_branch
            %74 = sbr.rel target = $region24
          $region23: #{tpu_custom_call.1} parent=15 // pred_region
            %75 = sst [smem:[#allocation10]] [#allocation13]
            %76 = sst [smem:[#allocation11]] [#allocation12]
          $region24: #{tpu_custom_call.1} parent=15 // pred_fallthru
            _
          %78 = shalt.err (0)
          %s80 = sshll.u32 %s1, 4
          %s81 = int_to_ptr.hbm [resolvable:$true] %s80
          %s82 = sshll.u32 [#allocation3], 4
          %s83 = int_to_ptr.vmem [resolvable:$true] %s82
          %85 = dma.hbm_to_vmem [thread:$0]  %s81, 512, %s83, %s72
          %s86 = smul.u32 32, 1
          %s87 = sshll.u32 %s86, 4
          %88 = dma.done [#allocation4], %s87
          %s89 = sshll.u32 %s86, 4
          %90 = dma.done %s72, %s89
          %v91 = vld [vmem:[#allocation2] sm:$0xff]
          %v92 = vld [vmem:[#allocation2 + $0x8] sm:$0xff]
          %v93 = vld [vmem:[#allocation2 + $0x10] sm:$0xff]
          %v94 = vld [vmem:[#allocation2 + $0x18] sm:$0xff]
          %v95 = vld [vmem:[#allocation3] sm:$0xff]
          %v96 = vld [vmem:[#allocation3 + $0x8] sm:$0xff]
          %v97 = vld [vmem:[#allocation3 + $0x10] sm:$0xff]
          %v98 = vld [vmem:[#allocation3 + $0x18] sm:$0xff]
          %v99 = vsub.f32 %v91, %v95
          %v100 = vsub.f32 %v92, %v96
          %v101 = vsub.f32 %v93, %v97
          %v102 = vsub.f32 %v94, %v98
          %v103 = vand.u32 2147483647, %v99
          %v104 = vand.u32 2147483647, %v100
          %v105 = vand.u32 2147483647, %v101
          %v106 = vand.u32 2147483647, %v102
          %v107 = vld [vmem:[#allocation5] sm:$0xff]
          %v108 = vadd.f32 %v103, %v104
          %v109 = vadd.f32 %v108, %v105
          %v110 = vadd.f32 %v109, %v106
          %v111 = vmul.f32 %v110, 0.00048828125
          %v112 = vadd.f32 %v107, %v111
          %113 = vst [vmem:[#allocation5] sm:$0xff] %v112
        $region16: #{tpu_custom_call.1} parent=11 // pred_fallthru
          _
        %p114 = scmp.eq.s32.totalorder %s17, 1
        // Predicated region
        $region25: #{tpu_custom_call.1} parent=11 // pred_check
          %p115 = pneg %p114
        $region26: #{tpu_custom_call.1} parent=11 // pred_check_branch
          %117 = sbr.rel (%p115) target = $region28
        $region27: #{tpu_custom_call.1} parent=11 // pred_region
          // Predicated region
          $region29: #{tpu_custom_call.1} parent=27 // pred_check
            _
          $region30: #{tpu_custom_call.1} parent=27 // pred_check_branch
            %119 = sbr.rel target = $region32
          $region31: #{tpu_custom_call.1} parent=27 // pred_region
            %120 = sst [smem:[#allocation10]] [#allocation15]
            %121 = sst [smem:[#allocation11]] [#allocation14]
          $region32: #{tpu_custom_call.1} parent=27 // pred_fallthru
            _
          %123 = shalt.err (0)
          %s125 = sshll.u32 %s2, 4
          %s126 = int_to_ptr.hbm [resolvable:$true] %s125
          %s127 = sshll.u32 [#allocation2], 4
          %s128 = int_to_ptr.vmem [resolvable:$true] %s127
          %130 = dma.hbm_to_vmem [thread:$0]  %s126, 256, %s128, [#allocation4]
          %s131 = scalar_lea.sflag [#allocation4], 2
          // Predicated region
          $region33: #{tpu_custom_call.1} parent=27 // pred_check
            _
          $region34: #{tpu_custom_call.1} parent=27 // pred_check_branch
            %133 = sbr.rel target = $region36
          $region35: #{tpu_custom_call.1} parent=27 // pred_region
            %134 = sst [smem:[#allocation10]] [#allocation17]
            %135 = sst [smem:[#allocation11]] [#allocation16]
          $region36: #{tpu_custom_call.1} parent=27 // pred_fallthru
            _
          %137 = shalt.err (0)
          %s139 = sshll.u32 %s3, 4
          %s140 = int_to_ptr.hbm [resolvable:$true] %s139
          %s141 = sshll.u32 [#allocation3], 4
          %s142 = int_to_ptr.vmem [resolvable:$true] %s141
          %144 = dma.hbm_to_vmem [thread:$0]  %s140, 256, %s142, %s131
          %s145 = smul.u32 16, 1
          %s146 = sshll.u32 %s145, 4
          %147 = dma.done [#allocation4], %s146
          %s148 = sshll.u32 %s145, 4
          %149 = dma.done %s131, %s148
          %v150 = vld [vmem:[#allocation2] sm:$0xff]
          %v151 = vld [vmem:[#allocation2 + $0x8] sm:$0xff]
          %v152 = vld [vmem:[#allocation3] sm:$0xff]
          %v153 = vld [vmem:[#allocation3 + $0x8] sm:$0xff]
          %v154 = vsub.f32 %v150, %v152
          %v155 = vsub.f32 %v151, %v153
          %v156 = vand.u32 2147483647, %v154
          %v157 = vand.u32 2147483647, %v155
          %v158 = vld [vmem:[#allocation5] sm:$0xff]
          %v159 = vadd.f32 %v156, %v157
          %v160 = vmul.f32 %v159, 0.0009765625
          %v161 = vadd.f32 %v158, %v160
          %162 = vst [vmem:[#allocation5] sm:$0xff] %v161
          // Predicated region
          $region37: #{tpu_custom_call.1} parent=27 // pred_check
            _
          $region38: #{tpu_custom_call.1} parent=27 // pred_check_branch
            %164 = sbr.rel target = $region40
          $region39: #{tpu_custom_call.1} parent=27 // pred_region
            %165 = sst [smem:[#allocation10]] [#allocation19]
            %166 = sst [smem:[#allocation11]] [#allocation18]
          $region40: #{tpu_custom_call.1} parent=27 // pred_fallthru
            _
          %168 = shalt.err (0)
          %s170 = sshll.u32 %s4, 4
          %s171 = int_to_ptr.hbm [resolvable:$true] %s170
          %s172 = sshll.u32 [#allocation2], 4
          %s173 = int_to_ptr.vmem [resolvable:$true] %s172
          %175 = dma.hbm_to_vmem [thread:$0]  %s171, 192, %s173, [#allocation4]
          // Predicated region
          $region41: #{tpu_custom_call.1} parent=27 // pred_check
            _
          $region42: #{tpu_custom_call.1} parent=27 // pred_check_branch
            %177 = sbr.rel target = $region44
          $region43: #{tpu_custom_call.1} parent=27 // pred_region
            %178 = sst [smem:[#allocation10]] [#allocation21]
            %179 = sst [smem:[#allocation11]] [#allocation20]
          $region44: #{tpu_custom_call.1} parent=27 // pred_fallthru
            _
          %181 = shalt.err (0)
          %s183 = sshll.u32 %s5, 4
          %s184 = int_to_ptr.hbm [resolvable:$true] %s183
          %s185 = sshll.u32 [#allocation3], 4
          %s186 = int_to_ptr.vmem [resolvable:$true] %s185
          %188 = dma.hbm_to_vmem [thread:$0]  %s184, 192, %s186, %s131
          %s189 = smul.u32 12, 1
          %s190 = sshll.u32 %s189, 4
          %191 = dma.done [#allocation4], %s190
          %s192 = sshll.u32 %s189, 4
          %193 = dma.done %s131, %s192
          %v194 = vld [vmem:[#allocation2] sm:$0xff]
          %v195 = vld [vmem:[#allocation2 + $0x8] sm:$0xff]
          %v196 = vld [vmem:[#allocation3] sm:$0xff]
          %v197 = vld [vmem:[#allocation3 + $0x8] sm:$0xff]
          %v198 = vsub.f32 %v194, %v196
          %v199 = vsub.f32 %v195, %v197
          %v200 = vand.u32 2147483647, %v198
          %v201 = vand.u32 2147483647, %v199
          %v202 = vlaneseq
          %v203 = vshrl.u32 %v202, 7
          %v204 = vadd.s32 %v203, 8
          %vm205 = vcmp.lt.s32.totalorder %v203, 12
          %vm206 = vcmp.lt.s32.totalorder %v204, 12
          %v207 = vsel %vm205, %v200, 0.0
          %v208 = vsel %vm206, %v201, 0.0
          %v209 = vld [vmem:[#allocation5] sm:$0xff]
          %v210 = vadd.f32 %v207, %v208
          %v211 = vmul.f32 %v210, 0.0013020834
          %v212 = vadd.f32 %v209, %v211
          %213 = vst [vmem:[#allocation5] sm:$0xff] %v212
          // Predicated region
          $region45: #{tpu_custom_call.1} parent=27 // pred_check
            _
          $region46: #{tpu_custom_call.1} parent=27 // pred_check_branch
            %215 = sbr.rel target = $region48
          $region47: #{tpu_custom_call.1} parent=27 // pred_region
            %216 = sst [smem:[#allocation10]] [#allocation23]
            %217 = sst [smem:[#allocation11]] [#allocation22]
          $region48: #{tpu_custom_call.1} parent=27 // pred_fallthru
            _
          %219 = shalt.err (0)
          %s221 = sshll.u32 %s6, 4
          %s222 = int_to_ptr.hbm [resolvable:$true] %s221
          %s223 = sshll.u32 [#allocation2], 4
          %s224 = int_to_ptr.vmem [resolvable:$true] %s223
          %226 = dma.hbm_to_vmem [thread:$0]  %s222, 96, %s224, [#allocation4]
          // Predicated region
          $region49: #{tpu_custom_call.1} parent=27 // pred_check
            _
          $region50: #{tpu_custom_call.1} parent=27 // pred_check_branch
            %228 = sbr.rel target = $region52
          $region51: #{tpu_custom_call.1} parent=27 // pred_region
            %229 = sst [smem:[#allocation10]] [#allocation25]
            %230 = sst [smem:[#allocation11]] [#allocation24]
          $region52: #{tpu_custom_call.1} parent=27 // pred_fallthru
            _
          %232 = shalt.err (0)
          %s234 = sshll.u32 %s7, 4
          %s235 = int_to_ptr.hbm [resolvable:$true] %s234
          %s236 = sshll.u32 [#allocation3], 4
          %s237 = int_to_ptr.vmem [resolvable:$true] %s236
          %239 = dma.hbm_to_vmem [thread:$0]  %s235, 96, %s237, %s131
          %s240 = smul.u32 6, 1
          %s241 = sshll.u32 %s240, 4
          %242 = dma.done [#allocation4], %s241
          %s243 = sshll.u32 %s240, 4
          %244 = dma.done %s131, %s243
          %v245 = vld [vmem:[#allocation2] sm:$0xff]
          %v246 = vld [vmem:[#allocation3] sm:$0xff]
          %v247 = vsub.f32 %v245, %v246
          %v248 = vand.u32 2147483647, %v247
          %vm249 = vcmp.lt.s32.totalorder %v203, 6
          %v250 = vsel %vm249, %v248, 0.0
          %v251 = vld [vmem:[#allocation5] sm:$0xff]
          %v252 = vadd.f32 %v250, 0.0
          %v253 = vmul.f32 %v252, 0.0027777778
          %v254 = vadd.f32 %v251, %v253
          %255 = vst [vmem:[#allocation5] sm:$0xff] %v254
        $region28: #{tpu_custom_call.1} parent=11 // pred_fallthru
          _
        %v256 = vld [vmem:[#allocation5] sm:$0xff]
        %257 = vst [vmem:[%s53] sm:$0xff] %v256
        %s258 = sand.u32 %s26, 1
        %s259 = scalar_lea.sflag [#allocation7], %s258
        %s260 = sand.u32 %s26, 1
        %s261 = smul.addr %s260, 8
        %s262 = scalar_lea.vmem [#allocation6], %s261
        // Predicated region
        $region53: #{tpu_custom_call.1} parent=11 // pred_check
          %p263 = pneg %p32
        $region54: #{tpu_custom_call.1} parent=11 // pred_check_branch
          %265 = sbr.rel (%p263) target = $region56
        $region55: #{tpu_custom_call.1} parent=11 // pred_region
          %267 = vsyncadd %s259, 0
          %s268 = smul.addr %s17, 8
          %s269 = scalar_lea.hbm %s8, %s268
          %s271 = sshll.u32 %s262, 4
          %s272 = int_to_ptr.vmem [resolvable:$true] %s271
          %s273 = sshll.u32 %s269, 4
          %s274 = int_to_ptr.hbm [resolvable:$true] %s273
          %276 = dma.vmem_to_hbm [thread:$0]  %s272, 128, %s274, %s259
        $region56: #{tpu_custom_call.1} parent=11 // pred_fallthru
          _
      $region12: #{tpu_custom_call.1} parent=5 // pred_fallthru
        _
      %p277 = scmp.le.s32.totalorder 1, %s17
      // Predicated region
      $region57: #{tpu_custom_call.1} parent=5 // pred_check
        %p278 = pneg %p277
      $region58: #{tpu_custom_call.1} parent=5 // pred_check_branch
        %280 = sbr.rel (%p278) target = $region60
      $region59: #{tpu_custom_call.1} parent=5 // pred_region
        %s281 = ssub.s32 %s17, 1
        // Predicated region
        $region61: #{tpu_custom_call.1} parent=59 // pred_check
          %p282 = pneg %p38
        $region62: #{tpu_custom_call.1} parent=59 // pred_check_branch
          %284 = sbr.rel (%p282) target = $region64
        $region63: #{tpu_custom_call.1} parent=59 // pred_region
          %s285 = sand.u32 %s29, 1
          %s286 = scalar_lea.sflag [#allocation7], %s285
          %s287 = sand.u32 %s29, 1
          %s288 = smul.addr %s287, 8
          %s289 = scalar_lea.vmem [#allocation6], %s288
          %291 = dma.done %s286, 128
        $region64: #{tpu_custom_call.1} parent=59 // pred_fallthru
          _
      $region60: #{tpu_custom_call.1} parent=5 // pred_fallthru
        _
    $region6: #{tpu_custom_call.1} parent=1 // loop_footer
      %s21 = sadd.s32 1, %s17
    $region7: #{tpu_custom_call.1} parent=1 // loop_footer_branch
      %16 = sbr.rel target = $region3
    $region8: #{tpu_custom_call.1} parent=1 // loop_exit
      _
    %292 = vsyncpa [#allocation7], 1
    %s293 = scalar_lea.sflag [#allocation7], 1
    %294 = vsyncpa %s293, 1
  %295 = vsyncmov [#allocation4]
  %s296 = vpop.sfrf %295
  %p297 = scmp.eq.s32.totalorder %s296, 0
  %p298 = pneg %p297
  %300 = shalt.err (%p298)
  %s301 = scalar_lea.sflag [#allocation4], 1
  %302 = vsyncmov %s301
  %s303 = vpop.sfrf %302
  %p304 = scmp.eq.s32.totalorder %s303, 0
  %p305 = pneg %p304
  %307 = shalt.err (%p305)
  %s308 = scalar_lea.sflag [#allocation4], 2
  %309 = vsyncmov %s308
  %s310 = vpop.sfrf %309
  %p311 = scmp.eq.s32.totalorder %s310, 0
  %p312 = pneg %p311
  %314 = shalt.err (%p312)
  %s315 = scalar_lea.sflag [#allocation4], 3
  %316 = vsyncmov %s315
  %s317 = vpop.sfrf %316
  %p318 = scmp.eq.s32.totalorder %s317, 0
  %p319 = pneg %p318
  %321 = shalt.err (%p319)

</llo_original>
